<compile_context>
chip_gen: v6e
topology: v6e:2x2x1
jax: 0.10.0
libtpu: 0.0.40
codegen_flags: <defaults>
</compile_context>

<pallas_src>
import functools

import jax
import jax.numpy as jnp
from jax.experimental import pallas as pl
from jax.experimental.pallas import tpu as pltpu

# ----------------------------------------------------------------------------
# cfg (widerface_640 subset, defined in-script; no file loads)
# ----------------------------------------------------------------------------
CFG = {
    "variance": [0.1, 0.2],
    "anchor_compensation": False,   # `ac`  -> use standard `match`
    "pyramid_anchor": True,         # `pa`  -> face / head / body parts
}
AC = CFG["anchor_compensation"]
PA = CFG["pyramid_anchor"]

# Per-step VMEM budget for the double-buffered input streams.  Conservative so
# it also fits v7x's 32 MiB scoped VMEM; v5e/v6e (128 MiB) have ample headroom.
_VMEM_INPUT_BUDGET_BYTES = 12 * 1024 * 1024
_MAX_ANCHORS_PER_STEP = 1 << 15


# ----------------------------------------------------------------------------
# Tiling helpers
# ----------------------------------------------------------------------------
def _pick_row_factor(batch, num_priors, max_factor=64):
    """Fold a divisor g of num_priors into the batch dim so kernel views are
    (batch*g, lanes) with batch*g a multiple of 8 (sublane-dense) while keeping
    at least ~128 anchors per row.  Pure view change: zero-copy reshape."""
    for g in range(1, max_factor + 1):
        if num_priors % g == 0 and (batch * g) % 8 == 0 and num_priors // g >= 128:
            return g
    for g in range(1, max_factor + 1):
        if num_priors % g == 0 and batch * g >= 8 and num_priors // g >= 128:
            return g
    return 1


def _pick_anchors_per_step(rows, anchors_per_row, num_classes,
                           loc_bytes, conf_bytes, override=None):
    """Anchors per grid step, sized against a dtype-aware VMEM budget that
    counts every double-buffered input stream (loc_p, loc_t, pos-mask, conf,
    code)."""
    if override is not None:
        ta = max(128, (int(override) // 128) * 128)
    else:
        per_anchor = 4 * (loc_bytes + 4 + 1) + num_classes * (conf_bytes + 1)
        ta = _VMEM_INPUT_BUDGET_BYTES // (2 * rows * per_anchor)
        ta = max(128, min(_MAX_ANCHORS_PER_STEP, (ta // 128) * 128))
    if ta >= anchors_per_row:
        return anchors_per_row, 1            # a single full-row block per part
    return ta, -(-anchors_per_row // ta)


# ----------------------------------------------------------------------------
# Pallas kernel
# ----------------------------------------------------------------------------
def _shift_left_lanes(x, k):
    """out[:, i] = x[:, i + k] (cyclic).  Static k -> lane slice + concat.
    Used to bring the other logits of an anchor onto its class-0 lane."""
    if k == 0:
        return x
    return jnp.concatenate([x[:, k:], x[:, :k]], axis=1)


def _make_part_kernel(rows, anchors_per_row, num_classes, anchors_per_step,
                      n_steps):
    C = num_classes
    L4 = anchors_per_row * 4          # valid lane count of the loc views
    LC = anchors_per_row * C          # valid lane count of the conf views
    W4 = anchors_per_step * 4         # loc-stream block width
    WC = anchors_per_step * C         # conf-stream block width
    has_tail = n_steps * anchors_per_step > anchors_per_row

    def kernel(loc_p_ref, loc_t_ref, posm_ref, conf_ref, code_ref,
               loc_out_ref, ce_out_ref):
        j = pl.program_id(0)

        @pl.when(j == 0)
        def _init():
            loc_out_ref[...] = jnp.zeros_like(loc_out_ref)
            ce_out_ref[...] = jnp.zeros_like(ce_out_ref)

        # ---- smooth-L1 localisation loss on positive anchors ----------------
        d = loc_p_ref[...].astype(jnp.float32) - loc_t_ref[...].astype(jnp.float32)
        if has_tail:
            lane4 = jax.lax.broadcasted_iota(jnp.int32, (rows, W4), 1)
            d = jnp.where((j * W4 + lane4) < L4, d, 0.0)
        ad = jnp.abs(d)
        sl1 = jnp.where(ad < 1.0, 0.5 * d * d, ad - 0.5)
        posm = posm_ref[...].astype(jnp.float32)      # 0 off-positive anchors
        loc_out_ref[...] += jnp.sum(sl1 * posm)

        # ---- cross-entropy sum over anchors with label > -1 -----------------
        x = conf_ref[...].astype(jnp.float32)
        cd = code_ref[...].astype(jnp.int32)
        if has_tail:
            lanec = jax.lax.broadcasted_iota(jnp.int32, (rows, WC), 1)
            inc = (j * WC + lanec) < LC
            x = jnp.where(inc, x, 0.0)
            cd = jnp.where(inc, cd, 0)
        onehot = (cd & 1).astype(jnp.float32)         # target-class lane & valid
        rep = (cd >> 1).astype(jnp.float32)           # class-0 lane & valid
        # Per-anchor logsumexp, evaluated on each anchor's class-0 lane: the
        # other C-1 logits of the same anchor are brought onto that lane with
        # static lane shifts (anchors are contiguous groups of C lanes).
        m = x
        shifted = [x]
        for k in range(1, C):
            xs = _shift_left_lanes(x, k)
            shifted.append(xs)
            m = jnp.maximum(m, xs)
        s = jnp.zeros_like(x)
        for xs in shifted:
            s = s + jnp.exp(xs - m)
        lse = m + jnp.log(s)
        ce_out_ref[...] += jnp.sum(rep * lse) - jnp.sum(onehot * x)

    return kernel


def _part_loss_sums(loc_p_v, loc_t_v, posm_v, conf_v, code_v, *,
                    num_classes, anchors_per_row, anchors_per_step, n_steps):
    """loc_p_v/loc_t_v/posm_v: (rows, anchors_per_row*4); conf_v/code_v:
    (rows, anchors_per_row*C).  Returns (loc_sum, ce_sum) f32 scalars."""
    rows = loc_p_v.shape[0]
    W4 = anchors_per_step * 4
    WC = anchors_per_step * num_classes
    kernel = _make_part_kernel(rows, anchors_per_row, num_classes,
                               anchors_per_step, n_steps)

    n_anchors = rows * anchors_per_row
    bytes_accessed = int(loc_p_v.size * loc_p_v.dtype.itemsize
                         + loc_t_v.size * loc_t_v.dtype.itemsize
                         + posm_v.size
                         + conf_v.size * conf_v.dtype.itemsize
                         + code_v.size + 8)
    cost = pl.CostEstimate(
        flops=int(n_anchors * (4 * 8 + num_classes * 10)),
        transcendentals=int(n_anchors * (num_classes + 1)),
        bytes_accessed=bytes_accessed,
    )

    loc_sum, ce_sum = pl.pallas_call(
        kernel,
        out_shape=(jax.ShapeDtypeStruct((1, 1), jnp.float32),
                   jax.ShapeDtypeStruct((1, 1), jnp.float32)),
        grid_spec=pltpu.PrefetchScalarGridSpec(
            num_scalar_prefetch=0,
            grid=(n_steps,),
            in_specs=[
                pl.BlockSpec((rows, W4), lambda j: (0, j)),   # loc_p (model)
                pl.BlockSpec((rows, W4), lambda j: (0, j)),   # loc_t (f32)
                pl.BlockSpec((rows, W4), lambda j: (0, j)),   # pos mask (int8)
                pl.BlockSpec((rows, WC), lambda j: (0, j)),   # conf (model)
                pl.BlockSpec((rows, WC), lambda j: (0, j)),   # code (int8)
            ],
            out_specs=(pl.BlockSpec((1, 1), lambda j: (0, 0)),
                       pl.BlockSpec((1, 1), lambda j: (0, 0))),
        ),
        compiler_params=pltpu.CompilerParams(
            dimension_semantics=("arbitrary",),
            vmem_limit_bytes=32 * 1024 * 1024,
        ),
        cost_estimate=cost,
    )(loc_p_v, loc_t_v, posm_v, conf_v, code_v)
    return loc_sum[0, 0], ce_sum[0, 0]


# ----------------------------------------------------------------------------
# Plain-JAX glue: SSD box utils / batched matching (mirrors layers/box_utils.py)
# ----------------------------------------------------------------------------
def point_form(boxes):
    # (cx, cy, w, h) -> (xmin, ymin, xmax, ymax)
    return jnp.concatenate(
        [boxes[:, :2] - boxes[:, 2:] / 2.0,
         boxes[:, :2] + boxes[:, 2:] / 2.0], axis=1)


def jaccard(box_a, box_b):
    max_xy = jnp.minimum(box_a[:, None, 2:], box_b[None, :, 2:])
    min_xy = jnp.maximum(box_a[:, None, :2], box_b[None, :, :2])
    inter_wh = jnp.clip(max_xy - min_xy, 0.0)
    inter = inter_wh[..., 0] * inter_wh[..., 1]
    area_a = ((box_a[:, 2] - box_a[:, 0]) * (box_a[:, 3] - box_a[:, 1]))[:, None]
    area_b = ((box_b[:, 2] - box_b[:, 0]) * (box_b[:, 3] - box_b[:, 1]))[None, :]
    return inter / (area_a + area_b - inter)


def encode(matched, priors, variances):
    g_cxcy = (matched[:, :2] + matched[:, 2:]) / 2.0 - priors[:, :2]
    g_cxcy = g_cxcy / (variances[0] * priors[:, 2:])
    g_wh = (matched[:, 2:] - matched[:, :2]) / priors[:, 2:]
    g_wh = jnp.log(g_wh) / variances[1]
    return jnp.concatenate([g_cxcy, g_wh], axis=1)


def match_batched(threshold, truths, obj_valid, labels, priors, variances):
    """Batched (vmapped) equivalent of box_utils.match over padded targets."""
    def one(tr, ov, lb):
        overlaps = jaccard(tr, point_form(priors))               # (maxO, P)
        overlaps = jnp.where(ov[:, None], overlaps, -1.0)
        best_prior_idx = jnp.argmax(overlaps, axis=1)            # (maxO,)
        best_truth_overlap = jnp.max(overlaps, axis=0)           # (P,)
        best_truth_idx = jnp.argmax(overlaps, axis=0)            # (P,)
        # every valid ground-truth box claims its best prior
        obj_ids = jnp.arange(tr.shape[0], dtype=best_truth_idx.dtype)
        best_truth_overlap = best_truth_overlap.at[best_prior_idx].set(
            jnp.where(ov, 2.0, best_truth_overlap[best_prior_idx]))
        best_truth_idx = best_truth_idx.at[best_prior_idx].set(
            jnp.where(ov, obj_ids, best_truth_idx[best_prior_idx]))
        matches = tr[best_truth_idx]                             # (P, 4)
        conf = lb[best_truth_idx].astype(jnp.int32) + 1
        conf = jnp.where(best_truth_overlap < threshold, 0, conf)
        loc = encode(matches, priors, variances)
        return loc, conf
    return jax.vmap(one)(truths, obj_valid, labels)


# ----------------------------------------------------------------------------
# Per-part forward (jitted): matching + zero-copy views + Pallas reduction
# ----------------------------------------------------------------------------
def _part_forward_impl(loc_data, conf_data, priors, truths, labels, obj_valid, *,
                       threshold, variances, num_classes, alpha, gamma,
                       tile_anchors):
    batch, num_priors = loc_data.shape[0], loc_data.shape[1]
    C = num_classes
    priors = priors[:num_priors, :]

    # GT <-> prior matching / target encoding (small, batched plain JAX).
    # TODO(synk): sfd_match (anchor_compensation=True) branch not implemented.
    loc_t, conf_t = match_batched(threshold, truths, obj_valid, labels,
                                  priors, variances)     # (B,P,4) f32, (B,P) i32
    pos = conf_t > 0
    valid = conf_t > -1
    n_pos = jnp.sum(pos.astype(jnp.float32))             # tiny; done in wrapper

    # Zero-copy kernel views of the model tensors (natural anchor-major order).
    g = _pick_row_factor(batch, num_priors)
    rows, apr = batch * g, num_priors // g
    loc_bytes = jnp.dtype(loc_data.dtype).itemsize
    conf_bytes = jnp.dtype(conf_data.dtype).itemsize
    aps, n_steps = _pick_anchors_per_step(rows, apr, C, loc_bytes, conf_bytes,
                                          override=tile_anchors)

    loc_p_v = loc_data.reshape(rows, apr * 4)
    conf_v = conf_data.reshape(rows, apr * C)

    # Side-band tensors, built directly in the kernel layout (int8: ~C+4 bytes
    # per anchor instead of a full relayout of the model tensors).
    # TODO(synk): evaluate bf16 loc_t to shave another ~25% of kernel traffic.
    loc_t_v = loc_t.astype(jnp.float32).reshape(rows, apr * 4)
    posm_v = jnp.broadcast_to(pos[..., None], (batch, num_priors, 4)
                              ).astype(jnp.int8).reshape(rows, apr * 4)
    cls = jnp.arange(C, dtype=jnp.int32)
    onehot = (cls[None, None, :] == conf_t[..., None]) & valid[..., None]
    rep = (cls[None, None, :] == 0) & valid[..., None]
    code_v = (onehot.astype(jnp.int8) + 2 * rep.astype(jnp.int8)
              ).reshape(rows, apr * C)

    loc_sum, ce_sum = _part_loss_sums(
        loc_p_v, loc_t_v, posm_v, conf_v, code_v,
        num_classes=C, anchors_per_row=apr,
        anchors_per_step=aps, n_steps=n_steps)

    # p_t_log = -F.cross_entropy(..., size_average=False)  (sum over anchors)
    p_t_log = -ce_sum
    p_t = jnp.exp(p_t_log)
    conf_loss = -alpha * ((1.0 - p_t) ** gamma * p_t_log)
    n_norm = jnp.maximum(1.0, n_pos)
    return conf_loss / n_norm, loc_sum / n_norm


def _pad_targets(targets):
    """Pad the ragged per-image targets to (B, max_objs, ...) + validity mask so
    matching is one batched computation (no per-sample retracing)."""
    max_objs = max(int(t.shape[0]) for t in targets)
    dummy = jnp.array([[0.0, 0.0, 1.0, 1.0]], jnp.float32)
    truths, labels, valid = [], [], []
    for t in targets:
        n = int(t.shape[0])
        tr = t[:, :4].astype(jnp.float32)
        lb = t[:, 4].astype(jnp.float32)
        if n < max_objs:
            tr = jnp.concatenate([tr, jnp.tile(dummy, (max_objs - n, 1))], axis=0)
            lb = jnp.concatenate([lb, jnp.zeros((max_objs - n,), jnp.float32)], 0)
        truths.append(tr)
        labels.append(lb)
        valid.append(jnp.arange(max_objs) < n)
    return jnp.stack(truths), jnp.stack(labels), jnp.stack(valid)


# ----------------------------------------------------------------------------
# focalLoss forward (JAX wrapper around the Pallas kernel)
# ----------------------------------------------------------------------------
class FocalLoss:
    def __init__(self, num_classes, overlap_thresh, neg_mining, encode_target,
                 use_gpu=True, gamma=2, alpha=0.25, use_pa=True,
                 tile_anchors=None):
        self.gamma = gamma
        self.alpha = alpha
        self.threshold = overlap_thresh
        self.num_classes = num_classes
        self.encode_target = encode_target
        self.do_neg_mining = neg_mining
        self.variance = tuple(CFG["variance"])
        self.use_pa = use_pa
        self.tile_anchors = tile_anchors
        self._part_fn = jax.jit(functools.partial(
            _part_forward_impl,
            threshold=float(overlap_thresh),
            variances=self.variance,
            num_classes=int(num_classes),
            alpha=float(alpha),
            gamma=float(gamma),
            tile_anchors=tile_anchors))

    def __call__(self, predictions, targets):
        truths, labels, obj_valid = _pad_targets(targets)
        if PA and self.use_pa:
            results = []
            for p in range(3):                       # face / head / body parts
                loc_data, conf_data, priors = predictions[3 * p: 3 * p + 3]
                results.append(self._part_fn(loc_data, conf_data, priors,
                                             truths, labels, obj_valid))
            # matches the original unpack order: part_forward -> (conf, loc)
            loss_l = tuple(r[0] for r in results)
            loss_c = tuple(r[1] for r in results)
            return loss_l, loss_c
        loc_data, conf_data, priors = predictions
        return self._part_fn(loc_data, conf_data, priors,
                             truths, labels, obj_valid)


# ----------------------------------------------------------------------------
# Plain-JAX reference (for the in-script correctness check)
# ----------------------------------------------------------------------------
def _reference_part_losses(loc_data, conf_data, priors, truths, labels, obj_valid,
                           threshold, variances, num_classes, alpha, gamma):
    num_priors = loc_data.shape[1]
    priors = priors[:num_priors, :]
    loc_t, conf_t = match_batched(threshold, truths, obj_valid, labels,
                                  priors, variances)
    pos = (conf_t > 0).astype(jnp.float32)
    d = loc_data.astype(jnp.float32) - loc_t
    ad = jnp.abs(d)
    sl1 = jnp.where(ad < 1.0, 0.5 * d * d, ad - 0.5).sum(-1)
    loc_loss = jnp.sum(sl1 * pos)
    logits = conf_data.astype(jnp.float32)
    lse = jax.scipy.special.logsumexp(logits, axis=-1)
    tgt = jnp.take_along_axis(
        logits, jnp.clip(conf_t, 0, num_classes - 1)[..., None], axis=-1)[..., 0]
    validf = (conf_t > -1).astype(jnp.float32)
    ce_sum = jnp.sum((lse - tgt) * validf)
    p_t_log = -ce_sum
    p_t = jnp.exp(p_t_log)
    conf_loss = -alpha * ((1.0 - p_t) ** gamma * p_t_log)
    n_norm = jnp.maximum(1.0, jnp.sum(pos))
    return conf_loss / n_norm, loc_loss / n_norm


def _assert_close(a, b, tol=1e-3):
    a = float(a)
    b = float(b)
    assert abs(a - b) <= tol * max(1.0, abs(a), abs(b)), (a, b)


# ----------------------------------------------------------------------------
# Demo
# ----------------------------------------------------------------------------
if __name__ == "__main__":
    B = 2            # batch
    P = 640          # num_priors per part (row fold g=4 -> (8, 160) anchors)
    C = 2            # num_classes (face vs background)

    # Deterministic priors (cx, cy, w, h).
    ii = jnp.arange(P)
    cx = ((ii % 16).astype(jnp.float32) + 0.5) / 16.0
    cy = (((ii // 16) % 16).astype(jnp.float32) + 0.5) / 16.0
    sizes = jnp.array([0.05, 0.1, 0.2, 0.3], jnp.float32)[ii % 4]
    priors = jnp.stack([cx, cy, sizes, sizes], axis=1)          # (P, 4)

    # Deterministic predictions for the 3 pyramid-anchor parts (face/head/body).
    key = jax.random.PRNGKey(0)
    preds = []
    for _ in range(3):
        key, k1, k2 = jax.random.split(key, 3)
        loc = 0.1 * jax.random.normal(k1, (B, P, 4), jnp.float32)
        conf = jax.random.normal(k2, (B, P, C), jnp.float32)
        preds.extend([loc, conf, priors])
    predictions = tuple(preds)   # 9-tuple, as the pa/use_pa branch expects

    # Ground-truth targets: list of (num_objs, 5) arrays, last col = label (0).
    targets = [
        jnp.array([[0.10, 0.10, 0.35, 0.40, 0.0],
                   [0.55, 0.50, 0.85, 0.90, 0.0]], jnp.float32),
        jnp.array([[0.20, 0.30, 0.50, 0.65, 0.0]], jnp.float32),
    ]

    criterion = FocalLoss(num_classes=C, overlap_thresh=0.35,
                          neg_mining=True, encode_target=False,
                          gamma=2, alpha=0.25, use_pa=True)
    loss_l, loss_c = criterion(predictions, targets)
    jax.block_until_ready((loss_l, loss_c))

    # Cross-check: force the multi-step grid (128 anchors/step over 160-anchor
    # rows) so accumulation + in-kernel tail masking are exercised; the losses
    # must match the single-step (full-row block) run above.
    criterion_small = FocalLoss(num_classes=C, overlap_thresh=0.35,
                                neg_mining=True, encode_target=False,
                                gamma=2, alpha=0.25, use_pa=True,
                                tile_anchors=128)
    loss_l2, loss_c2 = criterion_small(predictions, targets)
    jax.block_until_ready((loss_l2, loss_c2))
    for a, b in zip(loss_l + loss_c, loss_l2 + loss_c2):
        _assert_close(a, b)

    # Plain-JAX reference per pyramid part.
    truths, labels, obj_valid = _pad_targets(targets)
    for part_idx in range(3):
        ld, cd, pr = predictions[3 * part_idx: 3 * part_idx + 3]
        ref_conf, ref_loc = _reference_part_losses(
            ld, cd, pr, truths, labels, obj_valid,
            criterion.threshold, criterion.variance, C,
            criterion.alpha, criterion.gamma)
        _assert_close(loss_l[part_idx], ref_conf)
        _assert_close(loss_c[part_idx], ref_loc)

    print("KERNEL_OK")
</pallas_src>

<mosaic_0001>
module attributes {stable_mosaic.version = 11 : i64} {
  func.func @kernel(%arg0: i32, %arg1: memref<8x640xf32, #tpu.memory_space<vmem>>, %arg2: memref<8x640xf32, #tpu.memory_space<vmem>>, %arg3: memref<8x640xi8, #tpu.memory_space<vmem>>, %arg4: memref<8x320xf32, #tpu.memory_space<vmem>>, %arg5: memref<8x320xi8, #tpu.memory_space<vmem>>, %arg6: memref<1x1xf32, #tpu.memory_space<vmem>>, %arg7: memref<1x1xf32, #tpu.memory_space<vmem>>) attributes {dimension_semantics = [#tpu.dimension_semantics<arbitrary>], iteration_bounds = array<i64: 1>, scalar_prefetch = 0 : i64, scratch_operands = 0 : i64, tpu.core_type = #tpu.core_type<tc>, window_params = [{transform_indices = @transform_0, window_bounds = array<i64: 8, 640>}, {transform_indices = @transform_1, window_bounds = array<i64: 8, 640>}, {transform_indices = @transform_2, window_bounds = array<i64: 8, 640>}, {transform_indices = @transform_3, window_bounds = array<i64: 8, 320>}, {transform_indices = @transform_4, window_bounds = array<i64: 8, 320>}, {pipeline_mode = #tpu.pipeline_mode<synchronous>, transform_indices = @transform_5, window_bounds = array<i64: 1, 1>}, {pipeline_mode = #tpu.pipeline_mode<synchronous>, transform_indices = @transform_6, window_bounds = array<i64: 1, 1>}]} {
    %c0_i32 = arith.constant 0 : i32
    %0 = arith.cmpi eq, %arg0, %c0_i32 : i32
    %1 = arith.extui %0 : i1 to i32
    %c0_i32_0 = arith.constant 0 : i32
    %2 = arith.cmpi ne, %1, %c0_i32_0 : i32
    scf.if %2 {
      %cst_25 = arith.constant 0.000000e+00 : f32
      %63 = vector.broadcast %cst_25 : f32 to vector<1x1xf32>
      %c0_26 = arith.constant 0 : index
      %c0_27 = arith.constant 0 : index
      %64 = vector.load %arg6[%c0_26, %c0_27] : memref<1x1xf32, #tpu.memory_space<vmem>>, vector<1x1xf32>
      tpu.vector_store %arg6[%c0_26, %c0_27], %63 {strides = array<i32>} : memref<1x1xf32, #tpu.memory_space<vmem>>, vector<1x1xf32>,
      %cst_28 = arith.constant 0.000000e+00 : f32
      %65 = vector.broadcast %cst_28 : f32 to vector<1x1xf32>
      %c0_29 = arith.constant 0 : index
      %c0_30 = arith.constant 0 : index
      %66 = vector.load %arg7[%c0_29, %c0_30] : memref<1x1xf32, #tpu.memory_space<vmem>>, vector<1x1xf32>
      tpu.vector_store %arg7[%c0_29, %c0_30], %65 {strides = array<i32>} : memref<1x1xf32, #tpu.memory_space<vmem>>, vector<1x1xf32>,
    } else {
    }
    %c0 = arith.constant 0 : index
    %c0_1 = arith.constant 0 : index
    %3 = vector.load %arg1[%c0, %c0_1] : memref<8x640xf32, #tpu.memory_space<vmem>>, vector<8x640xf32>
    %c0_2 = arith.constant 0 : index
    %c0_3 = arith.constant 0 : index
    %4 = vector.load %arg2[%c0_2, %c0_3] : memref<8x640xf32, #tpu.memory_space<vmem>>, vector<8x640xf32>
    %5 = arith.subf %3, %4 : vector<8x640xf32>
    %6 = math.absf %5 : vector<8x640xf32>
    %cst = arith.constant 1.000000e+00 : f32
    %7 = vector.broadcast %cst : f32 to vector<8x640xf32>
    %8 = arith.cmpf olt, %6, %7 : vector<8x640xf32>
    %cst_4 = arith.constant 5.000000e-01 : f32
    %9 = vector.broadcast %cst_4 : f32 to vector<8x640xf32>
    %10 = arith.mulf %9, %5 : vector<8x640xf32>
    %11 = arith.mulf %10, %5 : vector<8x640xf32>
    %cst_5 = arith.constant 5.000000e-01 : f32
    %12 = vector.broadcast %cst_5 : f32 to vector<8x640xf32>
    %13 = arith.subf %6, %12 : vector<8x640xf32>
    %14 = arith.select %8, %11, %13 : vector<8x640xi1>, vector<8x640xf32>
    %c0_6 = arith.constant 0 : index
    %c0_7 = arith.constant 0 : index
    %15 = vector.load %arg3[%c0_6, %c0_7] : memref<8x640xi8, #tpu.memory_space<vmem>>, vector<8x640xi8>
    %16 = arith.sitofp %15 : vector<8x640xi8> to vector<8x640xf32>
    %c0_8 = arith.constant 0 : index
    %c0_9 = arith.constant 0 : index
    %17 = vector.load %arg6[%c0_8, %c0_9] : memref<1x1xf32, #tpu.memory_space<vmem>>, vector<1x1xf32>
    %18 = arith.mulf %14, %16 : vector<8x640xf32>
    %19 = vector.shape_cast %18 : vector<8x640xf32> to vector<1x8x640xf32>
    %cst_10 = arith.constant dense<0.000000e+00> : vector<1xf32>
    %20 = vector.multi_reduction <add>, %19, %cst_10 [1, 2] : vector<1x8x640xf32> to vector<1xf32>
    %21 = vector.shape_cast %20 : vector<1xf32> to vector<1x1x1xf32>
    %22 = vector.extract %21[0, 0, 0] : f32 from vector<1x1x1xf32>
    %23 = vector.broadcast %22 : f32 to vector<1x1xf32>
    %24 = arith.addf %17, %23 : vector<1x1xf32>
    %c0_11 = arith.constant 0 : index
    %c0_12 = arith.constant 0 : index
    %25 = vector.load %arg6[%c0_11, %c0_12] : memref<1x1xf32, #tpu.memory_space<vmem>>, vector<1x1xf32>
    tpu.vector_store %arg6[%c0_11, %c0_12], %24 {strides = array<i32>} : memref<1x1xf32, #tpu.memory_space<vmem>>, vector<1x1xf32>,
    %c0_13 = arith.constant 0 : index
    %c0_14 = arith.constant 0 : index
    %26 = vector.load %arg4[%c0_13, %c0_14] : memref<8x320xf32, #tpu.memory_space<vmem>>, vector<8x320xf32>
    %c0_15 = arith.constant 0 : index
    %c0_16 = arith.constant 0 : index
    %27 = vector.load %arg5[%c0_15, %c0_16] : memref<8x320xi8, #tpu.memory_space<vmem>>, vector<8x320xi8>
    %28 = arith.extsi %27 : vector<8x320xi8> to vector<8x320xi32>
    %c1_i32 = arith.constant 1 : i32
    %29 = vector.broadcast %c1_i32 : i32 to vector<8x320xi32>
    %30 = arith.andi %28, %29 : vector<8x320xi32>
    %31 = arith.sitofp %30 : vector<8x320xi32> to vector<8x320xf32>
    %c1_i32_17 = arith.constant 1 : i32
    %32 = vector.broadcast %c1_i32_17 : i32 to vector<8x320xi32>
    %33 = arith.shrsi %28, %32 : vector<8x320xi32>
    %34 = arith.sitofp %33 : vector<8x320xi32> to vector<8x320xf32>
    %35 = vector.extract_strided_slice %26 {offsets = [0, 1], sizes = [8, 319], strides = [1, 1]} : vector<8x320xf32> to vector<8x319xf32>
    %36 = vector.extract_strided_slice %26 {offsets = [0, 0], sizes = [8, 1], strides = [1, 1]} : vector<8x320xf32> to vector<8x1xf32>
    %37 = tpu.concatenate %35, %36 in 1 : vector<8x319xf32>, vector<8x1xf32> -> vector<8x320xf32>
    %38 = arith.maximumf %26, %37 : vector<8x320xf32>
    %cst_18 = arith.constant 0.000000e+00 : f32
    %39 = vector.broadcast %cst_18 : f32 to vector<8x320xf32>
    %40 = arith.subf %26, %38 : vector<8x320xf32>
    %41 = math.exp %40 : vector<8x320xf32>
    %42 = arith.addf %39, %41 : vector<8x320xf32>
    %43 = arith.subf %37, %38 : vector<8x320xf32>
    %44 = math.exp %43 : vector<8x320xf32>
    %45 = arith.addf %42, %44 : vector<8x320xf32>
    %46 = math.log %45 : vector<8x320xf32>
    %47 = arith.addf %38, %46 : vector<8x320xf32>
    %c0_19 = arith.constant 0 : index
    %c0_20 = arith.constant 0 : index
    %48 = vector.load %arg7[%c0_19, %c0_20] : memref<1x1xf32, #tpu.memory_space<vmem>>, vector<1x1xf32>
    %49 = arith.mulf %34, %47 : vector<8x320xf32>
    %50 = vector.shape_cast %49 : vector<8x320xf32> to vector<1x8x320xf32>
    %cst_21 = arith.constant dense<0.000000e+00> : vector<1xf32>
    %51 = vector.multi_reduction <add>, %50, %cst_21 [1, 2] : vector<1x8x320xf32> to vector<1xf32>
    %52 = vector.shape_cast %51 : vector<1xf32> to vector<1x1x1xf32>
    %53 = vector.extract %52[0, 0, 0] : f32 from vector<1x1x1xf32>
    %54 = arith.mulf %31, %26 : vector<8x320xf32>
    %55 = vector.shape_cast %54 : vector<8x320xf32> to vector<1x8x320xf32>
    %cst_22 = arith.constant dense<0.000000e+00> : vector<1xf32>
    %56 = vector.multi_reduction <add>, %55, %cst_22 [1, 2] : vector<1x8x320xf32> to vector<1xf32>
    %57 = vector.shape_cast %56 : vector<1xf32> to vector<1x1x1xf32>
    %58 = vector.extract %57[0, 0, 0] : f32 from vector<1x1x1xf32>
    %59 = arith.subf %53, %58 : f32
    %60 = vector.broadcast %59 : f32 to vector<1x1xf32>
    %61 = arith.addf %48, %60 : vector<1x1xf32>
    %c0_23 = arith.constant 0 : index
    %c0_24 = arith.constant 0 : index
    %62 = vector.load %arg7[%c0_23, %c0_24] : memref<1x1xf32, #tpu.memory_space<vmem>>, vector<1x1xf32>
    tpu.vector_store %arg7[%c0_23, %c0_24], %61 {strides = array<i32>} : memref<1x1xf32, #tpu.memory_space<vmem>>, vector<1x1xf32>,
    return
  }
  func.func @transform_0(%arg0: i32) -> (i32, i32) {
    %c0_i32 = arith.constant 0 : i32
    %c0_i32_0 = arith.constant 0 : i32
    return %c0_i32, %arg0 : i32, i32
  }
  func.func @transform_1(%arg0: i32) -> (i32, i32) {
    %c0_i32 = arith.constant 0 : i32
    %c0_i32_0 = arith.constant 0 : i32
    return %c0_i32, %arg0 : i32, i32
  }
  func.func @transform_2(%arg0: i32) -> (i32, i32) {
    %c0_i32 = arith.constant 0 : i32
    %c0_i32_0 = arith.constant 0 : i32
    return %c0_i32, %arg0 : i32, i32
  }
  func.func @transform_3(%arg0: i32) -> (i32, i32) {
    %c0_i32 = arith.constant 0 : i32
    %c0_i32_0 = arith.constant 0 : i32
    return %c0_i32, %arg0 : i32, i32
  }
  func.func @transform_4(%arg0: i32) -> (i32, i32) {
    %c0_i32 = arith.constant 0 : i32
    %c0_i32_0 = arith.constant 0 : i32
    return %c0_i32, %arg0 : i32, i32
  }
  func.func @transform_5(%arg0: i32) -> (i32, i32) {
    %c0_i32 = arith.constant 0 : i32
    %c0_i32_0 = arith.constant 0 : i32
    %c0_i32_1 = arith.constant 0 : i32
    return %c0_i32, %c0_i32_0 : i32, i32
  }
  func.func @transform_6(%arg0: i32) -> (i32, i32) {
    %c0_i32 = arith.constant 0 : i32
    %c0_i32_0 = arith.constant 0 : i32
    %c0_i32_1 = arith.constant 0 : i32
    return %c0_i32, %c0_i32_0 : i32, i32
  }
}

</mosaic_0001>

<llo_original>
// kernel: _part_forward_impl.1
$region0: #{_part_forward_impl.1}
  #allocation0 [shape = 'u32[]', space=smem, size = 0x4, offset = 0x4, fixed_abs, tag = 'smem constant byte address 0x4 - core index']
  #allocation1 [shape = 'u32[144,128]{1,0:T(1,128)}', space=vmem, size = 0x12000, scoped, tag = 'internal scratch']
  %s0 = inlined_call_operand.vmem [shape: f32[8,640], index: 0, kind: input, shape index: {}]
  %s1 = inlined_call_operand.vmem [shape: f32[8,640], index: 1, kind: input, shape index: {}]
  %s2 = inlined_call_operand.vmem [shape: s8[8,640], index: 2, kind: input, shape index: {}]
  %s3 = inlined_call_operand.vmem [shape: f32[8,320], index: 3, kind: input, shape index: {}]
  %s4 = inlined_call_operand.vmem [shape: s8[8,320], index: 4, kind: input, shape index: {}]
  %s5 = inlined_call_operand.hbm [shape: f32[1,1], index: 5, kind: output, shape index: {0}]
  %s6 = inlined_call_operand.hbm [shape: f32[1,1], index: 6, kind: output, shape index: {1}]
  %7 = xla_tuple %s5, %s6
  %s8 = sld [smem:[#allocation0]]
  $region42: #{_part_forward_impl.1} parent=0
    _
  %s10 = ssub.s32 1, %s8
  %s11 = scalar_select 0, %s10, %s8
  $region1: #{_part_forward_impl.1} parent=0
    #allocation2 [shape = 'u8[512]{0}', space=vmem, size = 0x400, scoped, tag = 'output window, operand 0, single buffered']
    #allocation3 [shape = 's32[1]{0}', space=sflag, size = 0x4, scoped, tag = 'scoped memory for _part_forward_impl.1']
    #allocation4 [shape = 'u8[512]{0}', space=vmem, size = 0x400, scoped, tag = 'output window, operand 1, single buffered']
    #allocation5 [shape = 's32[1]{0}', space=sflag, size = 0x4, scoped, tag = 'scoped memory for _part_forward_impl.1']
    %12 = vsyncpa [#allocation3], 0
    %13 = vsyncpa [#allocation5], 0
    // Predicated region
    $region2: #{_part_forward_impl.1} parent=1 // pred_check
      _
    $region3: #{_part_forward_impl.1} parent=1 // pred_check_branch
      %15 = sbr.rel (0) target = $region5
    $region4: #{_part_forward_impl.1} parent=1 // pred_region
      _
    $region5: #{_part_forward_impl.1} parent=1 // pred_fallthru
      _
    // Predicated region
    $region6: #{_part_forward_impl.1} parent=1 // pred_check
      _
    $region7: #{_part_forward_impl.1} parent=1 // pred_check_branch
      %17 = sbr.rel (0) target = $region9
    $region8: #{_part_forward_impl.1} parent=1 // pred_region
      _
    $region9: #{_part_forward_impl.1} parent=1 // pred_fallthru
      _
    // Predicated region
    $region10: #{_part_forward_impl.1} parent=1 // pred_check
      _
    $region11: #{_part_forward_impl.1} parent=1 // pred_check_branch
      %19 = sbr.rel (0) target = $region13
    $region12: #{_part_forward_impl.1} parent=1 // pred_region
      _
    $region13: #{_part_forward_impl.1} parent=1 // pred_fallthru
      _
    // Predicated region
    $region14: #{_part_forward_impl.1} parent=1 // pred_check
      _
    $region15: #{_part_forward_impl.1} parent=1 // pred_check_branch
      %21 = sbr.rel (0) target = $region17
    $region16: #{_part_forward_impl.1} parent=1 // pred_region
      _
    $region17: #{_part_forward_impl.1} parent=1 // pred_fallthru
      _
    // Predicated region
    $region18: #{_part_forward_impl.1} parent=1 // pred_check
      _
    $region19: #{_part_forward_impl.1} parent=1 // pred_check_branch
      %23 = sbr.rel (0) target = $region21
    $region20: #{_part_forward_impl.1} parent=1 // pred_region
      _
    $region21: #{_part_forward_impl.1} parent=1 // pred_fallthru
      _
    %p24 = scmp.eq.s32.totalorder 0, 0
    // Predicated region
    $region22: #{_part_forward_impl.1} parent=1 // pred_check
      %p25 = pneg %p24
    $region23: #{_part_forward_impl.1} parent=1 // pred_check_branch
      %27 = sbr.rel (%p25) target = $region25
    $region24: #{_part_forward_impl.1} parent=1 // pred_region
      %vm28 = vcmask 0
      %29 = vst.msk [vmem:[#allocation2] sm:$0x1] %vm28, 0.0
      %30 = vst.msk [vmem:[#allocation4] sm:$0x1] %vm28, 0.0
    $region25: #{_part_forward_impl.1} parent=1 // pred_fallthru
      _
    %v31 = vld [vmem:[%s0] sm:$0xff]
    %v32 = vld [vmem:[%s0 + $0x8] sm:$0xff]
    %v33 = vld [vmem:[%s0 + $0x10] sm:$0xff]
    %v34 = vld [vmem:[%s0 + $0x18] sm:$0xff]
    %v35 = vld [vmem:[%s0 + $0x20] sm:$0xff]
    %v36 = vld [vmem:[%s1] sm:$0xff]
    %v37 = vld [vmem:[%s1 + $0x8] sm:$0xff]
    %v38 = vld [vmem:[%s1 + $0x10] sm:$0xff]
    %v39 = vld [vmem:[%s1 + $0x18] sm:$0xff]
    %v40 = vld [vmem:[%s1 + $0x20] sm:$0xff]
    %v41 = vsub.f32 %v31, %v36
    %v42 = vsub.f32 %v32, %v37
    %v43 = vsub.f32 %v33, %v38
    %v44 = vsub.f32 %v34, %v39
    %v45 = vsub.f32 %v35, %v40
    %v46 = vand.u32 2147483647, %v41
    %v47 = vand.u32 2147483647, %v42
    %v48 = vand.u32 2147483647, %v43
    %v49 = vand.u32 2147483647, %v44
    %v50 = vand.u32 2147483647, %v45
    %vm51 = vcmp.lt.f32.partialorder %v46, 1.0
    %vm52 = vcmp.lt.f32.partialorder %v47, 1.0
    %vm53 = vcmp.lt.f32.partialorder %v48, 1.0
    %vm54 = vcmp.lt.f32.partialorder %v49, 1.0
    %vm55 = vcmp.lt.f32.partialorder %v50, 1.0
    %v56 = vmul.f32 %v41, 0.5
    %v57 = vmul.f32 %v42, 0.5
    %v58 = vmul.f32 %v43, 0.5
    %v59 = vmul.f32 %v44, 0.5
    %v60 = vmul.f32 %v45, 0.5
    %v61 = vmul.f32 %v56, %v41
    %v62 = vmul.f32 %v57, %v42
    %v63 = vmul.f32 %v58, %v43
    %v64 = vmul.f32 %v59, %v44
    %v65 = vmul.f32 %v60, %v45
    %v66 = vsub.f32 %v46, 0.5
    %v67 = vsub.f32 %v47, 0.5
    %v68 = vsub.f32 %v48, 0.5
    %v69 = vsub.f32 %v49, 0.5
    %v70 = vsub.f32 %v50, 0.5
    %v71 = vsel %vm51, %v61, %v66
    %v72 = vsel %vm52, %v62, %v67
    %v73 = vsel %vm53, %v63, %v68
    %v74 = vsel %vm54, %v64, %v69
    %v75 = vsel %vm55, %v65, %v70
    %v76 = vld [vmem:[%s2] sm:$0xff]
    %v77 = vld [vmem:[%s2 + $0x8] sm:$0x3]
    %v78 = vunpack.c.0.s8 %v76
    %v79 = vunpack.c.1.s8 %v76
    %v80 = vunpack.c.2.s8 %v76
    %v81 = vunpack.c.3.s8 %v76
    %v82 = vunpack.c.0.s8 %v77
    %v83 = vcvt.s32.f32 %v78
    %v84 = vcvt.s32.f32 %v79
    %v85 = vcvt.s32.f32 %v80
    %v86 = vcvt.s32.f32 %v81
    %v87 = vcvt.s32.f32 %v82
    %v88 = vld [vmem:[#allocation2] sm:$0x1]
    %v89 = vmul.f32 %v71, %v83
    %v90 = vmul.f32 %v72, %v84
    %v91 = vmul.f32 %v73, %v85
    %v92 = vmul.f32 %v74, %v86
    %v93 = vmul.f32 %v75, %v87
    %v94 = vadd.f32 %v89, %v90
    %v95 = vadd.f32 %v94, %v91
    %v96 = vadd.f32 %v95, %v92
    %v97 = vadd.f32 %v96, %v93
    %98 = vadd.xlane.f32.xlu0 %v97
    %v99 = vpop.xlane.xlu0 %98
    %v100 = vrot.slane %v99, 4
    %v101 = vadd.f32 %v99, %v100
    %v102 = vrot.slane %v101, 2
    %v103 = vadd.f32 %v101, %v102
    %v104 = vrot.slane %v103, 1
    %v105 = vadd.f32 %v103, %v104
    %s106 = vtos %v105
    %v107 = vstv %s106
    %v108 = vadd.f32 %v88, %v107
    %vm109 = vcmask 0
    %110 = vst.msk [vmem:[#allocation2] sm:$0x1] %vm109, %v108
    %v111 = vld [vmem:[%s3] sm:$0xff]
    %v112 = vld [vmem:[%s3 + $0x8] sm:$0xff]
    %v113 = vld [vmem:[%s3 + $0x10] sm:$0xff]
    %v114 = vld [vmem:[%s4] sm:$0x3f]
    %v115 = vunpack.c.0.s8 %v114
    %v116 = vunpack.c.1.s8 %v114
    %v117 = vunpack.c.2.s8 %v114
    %v118 = vand.u32 %v115, 1
    %v119 = vand.u32 %v116, 1
    %v120 = vand.u32 %v117, 1
    %v121 = vcvt.s32.f32 %v118
    %v122 = vcvt.s32.f32 %v119
    %v123 = vcvt.s32.f32 %v120
    %v124 = vshra.s32 %v115, 1
    %v125 = vshra.s32 %v116, 1
    %v126 = vshra.s32 %v117, 1
    %v127 = vcvt.s32.f32 %v124
    %v128 = vcvt.s32.f32 %v125
    %v129 = vcvt.s32.f32 %v126
    %133 = vrot.lane.b32.xlu0 %v111, 127
    %v134 = vpop.permute.xlu0 %133
    %135 = vrot.lane.b32.xlu0 %v112, 127
    %v136 = vpop.permute.xlu0 %135
    %137 = vrot.lane.b32.xlu0 %v113, 127
    %v138 = vpop.permute.xlu0 %137
    %vm139 = vcmask 1039360
    %v140 = vsel %vm139, %v134, %v136
    %v141 = vsel %vm139, %v136, %v138
    %145 = vrot.lane.b32.xlu0 %v111, 63
    %v146 = vpop.permute.xlu0 %145
    %vm148 = vcmask 515072
    %v149 = vsel %vm148, %v138, %v146
    %v150 = vmax.f32 %v111, %v140
    %v151 = vmax.f32 %v112, %v141
    %v152 = vmax.f32 %v113, %v149
    %v153 = vsub.f32 %v111, %v150
    %v154 = vsub.f32 %v112, %v151
    %v155 = vsub.f32 %v113, %v152
    %v156 = vmul.f32 %v153, 1.442695
    %v157 = vpow.pop %v156
    %v158 = vmul.f32 %v154, 1.442695
    %v159 = vpow.pop %v158
    %v160 = vmul.f32 %v155, 1.442695
    %v161 = vpow.pop %v160
    %v162 = vadd.f32 %v157, 0.0
    %v163 = vadd.f32 %v159, 0.0
    %v164 = vadd.f32 %v161, 0.0
    %v165 = vsub.f32 %v140, %v150
    %v166 = vsub.f32 %v141, %v151
    %v167 = vsub.f32 %v149, %v152
    %v168 = vmul.f32 %v165, 1.442695
    %v169 = vpow.pop %v168
    %v170 = vmul.f32 %v166, 1.442695
    %v171 = vpow.pop %v170
    %v172 = vmul.f32 %v167, 1.442695
    %v173 = vpow.pop %v172
    %v174 = vadd.f32 %v162, %v169
    %v175 = vadd.f32 %v163, %v171
    %v176 = vadd.f32 %v164, %v173
    %v177 = vlog2.pop %v174
    %v178 = vmul.f32 %v177, 0.6931472
    %v179 = vlog2.pop %v175
    %v180 = vmul.f32 %v179, 0.6931472
    %v181 = vlog2.pop %v176
    %v182 = vmul.f32 %v181, 0.6931472
    %v183 = vadd.f32 %v150, %v178
    %v184 = vadd.f32 %v151, %v180
    %v185 = vadd.f32 %v152, %v182
    %v186 = vld [vmem:[#allocation4] sm:$0x1]
    %v187 = vmul.f32 %v127, %v183
    %v188 = vmul.f32 %v128, %v184
    %v189 = vmul.f32 %v129, %v185
    %v190 = vadd.f32 %v187, %v188
    %vm191 = vcmask 523264
    %v192 = vsel %vm191, %v189, 0.0
    %v193 = vadd.f32 %v190, %v192
    %194 = vadd.xlane.f32.xlu0 %v193
    %v195 = vpop.xlane.xlu0 %194
    %v196 = vrot.slane %v195, 4
    %v197 = vadd.f32 %v195, %v196
    %v198 = vrot.slane %v197, 2
    %v199 = vadd.f32 %v197, %v198
    %v200 = vrot.slane %v199, 1
    %v201 = vadd.f32 %v199, %v200
    %s202 = vtos %v201
    %v203 = vmul.f32 %v121, %v111
    %v204 = vmul.f32 %v122, %v112
    %v205 = vmul.f32 %v123, %v113
    %v206 = vadd.f32 %v203, %v204
    %v207 = vsel %vm191, %v205, 0.0
    %v208 = vadd.f32 %v206, %v207
    %209 = vadd.xlane.f32.xlu0 %v208
    %v210 = vpop.xlane.xlu0 %209
    %v211 = vrot.slane %v210, 4
    %v212 = vadd.f32 %v210, %v211
    %v213 = vrot.slane %v212, 2
    %v214 = vadd.f32 %v212, %v213
    %v215 = vrot.slane %v214, 1
    %v216 = vadd.f32 %v214, %v215
    %s217 = vtos %v216
    %s218 = ssub.f32 %s202, %s217
    %v219 = vstv %s218
    %v220 = vadd.f32 %v186, %v219
    %221 = vst.msk [vmem:[#allocation4] sm:$0x1] %vm109, %v220
    // Predicated region
    $region26: #{_part_forward_impl.1} parent=1 // pred_check
      _
    $region27: #{_part_forward_impl.1} parent=1 // pred_check_branch
      %223 = sbr.rel (0) target = $region29
    $region28: #{_part_forward_impl.1} parent=1 // pred_region
      %s225 = ssub.s32 16, 16
      %226 = vsyncadd [#allocation3], %s225
      %s228 = sshll.u32 [#allocation2], 4
      %s229 = int_to_ptr.vmem [resolvable:$true] %s228
      %231 = dma.vmem_to_hbm [thread:$0]  %s229, 16, %s5, [#allocation3]
    $region29: #{_part_forward_impl.1} parent=1 // pred_fallthru
      _
    // Predicated region
    $region30: #{_part_forward_impl.1} parent=1 // pred_check
      _
    $region31: #{_part_forward_impl.1} parent=1 // pred_check_branch
      %233 = sbr.rel (0) target = $region33
    $region32: #{_part_forward_impl.1} parent=1 // pred_region
      %s235 = ssub.s32 16, 16
      %236 = vsyncadd [#allocation5], %s235
      %s238 = sshll.u32 [#allocation4], 4
      %s239 = int_to_ptr.vmem [resolvable:$true] %s238
      %241 = dma.vmem_to_hbm [thread:$0]  %s239, 16, %s6, [#allocation5]
    $region33: #{_part_forward_impl.1} parent=1 // pred_fallthru
      _
    // Predicated region
    $region34: #{_part_forward_impl.1} parent=1 // pred_check
      _
    $region35: #{_part_forward_impl.1} parent=1 // pred_check_branch
      %243 = sbr.rel (0) target = $region37
    $region36: #{_part_forward_impl.1} parent=1 // pred_region
      %244 = dma.done [#allocation3], 16
    $region37: #{_part_forward_impl.1} parent=1 // pred_fallthru
      _
    // Predicated region
    $region38: #{_part_forward_impl.1} parent=1 // pred_check
      _
    $region39: #{_part_forward_impl.1} parent=1 // pred_check_branch
      %246 = sbr.rel (0) target = $region41
    $region40: #{_part_forward_impl.1} parent=1 // pred_region
      %247 = dma.done [#allocation5], 16
    $region41: #{_part_forward_impl.1} parent=1 // pred_fallthru
      _
    %248 = vsyncpa [#allocation3], 1
    %249 = vsyncpa [#allocation5], 1

</llo_original>
